<compile_context>
chip_gen: v7x
topology: tpu7x:2x2x1
jax: 0.10.0
libtpu: 0.0.40
codegen_flags: <defaults>
</compile_context>

<pallas_src>
import numpy as np
import jax
import jax.numpy as jnp
from jax.experimental import pallas as pl
from jax.experimental.pallas import tpu as pltpu


# ----------------------------------------------------------------------------
# Pallas kernel: fused identity pass-through of (input_ids, attention_mask).
# ----------------------------------------------------------------------------
def _passthrough_kernel(ids_ref, mask_ref, ids_out_ref, mask_out_ref):
    # Whole-tile vector loads/stores; lane-dense (last dim is a multiple of 128
    # or the full extent), so stores lower to unmasked `vst`.
    ids_out_ref[...] = ids_ref[...]
    mask_out_ref[...] = mask_ref[...]


def _pick_tile(dim: int, preferred: int, align: int) -> int:
    """Pick a legal tile along one dim.

    Returns `preferred` (a multiple of `align`) when the dim is large and
    alignable; otherwise the full dim extent, which is always legal on TPU
    regardless of (8, 128) divisibility.
    """
    if dim <= preferred or dim % align != 0:
        return dim
    return preferred


def passthrough(input_ids: jax.Array, attention_mask: jax.Array,
                *, tile_b: int = 256, tile_s: int = 2048):
    """Move both [batch, seq] tensors through one aliased, tiled Pallas copy."""
    batch, seq = input_ids.shape
    assert attention_mask.shape == (batch, seq)

    tb = _pick_tile(batch, tile_b, 8)     # sublane axis: multiple of 8
    ts = _pick_tile(seq, tile_s, 128)     # lane axis:    multiple of 128
    grid = (pl.cdiv(batch, tb), pl.cdiv(seq, ts))

    spec = pl.BlockSpec((tb, ts), lambda i, j: (i, j))

    return pl.pallas_call(
        _passthrough_kernel,
        out_shape=(
            jax.ShapeDtypeStruct((batch, seq), input_ids.dtype),
            jax.ShapeDtypeStruct((batch, seq), attention_mask.dtype),
        ),
        grid=grid,
        in_specs=[spec, spec],
        out_specs=(spec, spec),
        # Outputs reuse the input HBM buffers — no second allocation/writeback.
        input_output_aliases={0: 0, 1: 1},
        compiler_params=pltpu.CompilerParams(
            dimension_semantics=("parallel", "parallel"),
        ),
    )(input_ids, attention_mask)


# ----------------------------------------------------------------------------
# JAX-side mirror of the abstract PyTorch interface.
# ----------------------------------------------------------------------------
class ValidatorInterface:
    """JAX/Pallas mirror of the abstract PyTorch ValidatorInterface.

    No parameters: the PyTorch __init__ registers nothing beyond nn.Module
    bookkeeping, so there are no weights to initialize.
    """

    def __init__(self, *args, **kwargs) -> None:
        pass

    # Device-side scaffold the interface implies (input movement only).
    @staticmethod
    def prepare_inputs(input_ids, attention_mask):
        return passthrough(input_ids, attention_mask)

    def forward(self, input_ids=None, lables=None, attention_mask=None,
                *args, **kwargs):
        # TODO(synk): abstract in the reference module — concrete subclasses
        # must supply the actual model compute; no Pallas equivalent exists.
        raise NotImplementedError()

    def predict_state(self, input_ids=None, *args, **kwargs):
        # TODO(synk): abstract in the reference module.
        raise NotImplementedError()

    def validate_model(self, input_ids=None, *args, **kwargs):
        # TODO(synk): abstract in the reference module.
        raise NotImplementedError()


if __name__ == "__main__":
    key = jax.random.PRNGKey(0)
    batch, seq = 2, 8
    input_ids = jax.random.randint(key, (batch, seq), 0, 1000, dtype=jnp.int32)
    attention_mask = jnp.ones((batch, seq), dtype=jnp.int32)

    # Host reference copies captured BEFORE the call: the pallas outputs alias
    # (donate) the input buffers, so the device arrays must not be read after.
    expected_ids = np.asarray(input_ids)
    expected_mask = np.asarray(attention_mask)

    # Interface behaves exactly like the PyTorch abstract class.
    model = ValidatorInterface()
    for fn in (model.forward, model.predict_state, model.validate_model):
        try:
            fn(input_ids=input_ids, attention_mask=attention_mask)
            raise AssertionError("abstract method did not raise")
        except NotImplementedError:
            pass

    # Exercise the fused Pallas scaffold and verify identity semantics.
    out_ids, out_mask = model.prepare_inputs(input_ids, attention_mask)
    jax.block_until_ready((out_ids, out_mask))
    assert out_ids.shape == (batch, seq) and out_ids.dtype == jnp.int32
    assert out_mask.shape == (batch, seq) and out_mask.dtype == jnp.int32
    assert np.array_equal(np.asarray(out_ids), expected_ids)
    assert np.array_equal(np.asarray(out_mask), expected_mask)

    print("KERNEL_OK")
</pallas_src>

<mosaic_0001>
module attributes {stable_mosaic.version = 11 : i64} {
  func.func @_passthrough_kernel(%arg0: i32, %arg1: i32, %arg2: memref<2x8xi32, #tpu.memory_space<vmem>>, %arg3: memref<2x8xi32, #tpu.memory_space<vmem>>, %arg4: memref<2x8xi32, #tpu.memory_space<vmem>>, %arg5: memref<2x8xi32, #tpu.memory_space<vmem>>) attributes {dimension_semantics = [#tpu.dimension_semantics<parallel>, #tpu.dimension_semantics<parallel>], iteration_bounds = array<i64: 1, 1>, scalar_prefetch = 0 : i64, scratch_operands = 0 : i64, tpu.core_type = #tpu.core_type<tc>, window_params = [{transform_indices = @transform_0, window_bounds = array<i64: 2, 8>}, {transform_indices = @transform_1, window_bounds = array<i64: 2, 8>}, {transform_indices = @transform_2, window_bounds = array<i64: 2, 8>}, {transform_indices = @transform_3, window_bounds = array<i64: 2, 8>}]} {
    %c0 = arith.constant 0 : index
    %c0_0 = arith.constant 0 : index
    %0 = vector.load %arg2[%c0, %c0_0] : memref<2x8xi32, #tpu.memory_space<vmem>>, vector<2x8xi32>
    %c0_1 = arith.constant 0 : index
    %c0_2 = arith.constant 0 : index
    %1 = vector.load %arg4[%c0_1, %c0_2] : memref<2x8xi32, #tpu.memory_space<vmem>>, vector<2x8xi32>
    tpu.vector_store %arg4[%c0_1, %c0_2], %0 {strides = array<i32>} : memref<2x8xi32, #tpu.memory_space<vmem>>, vector<2x8xi32>,
    %c0_3 = arith.constant 0 : index
    %c0_4 = arith.constant 0 : index
    %2 = vector.load %arg3[%c0_3, %c0_4] : memref<2x8xi32, #tpu.memory_space<vmem>>, vector<2x8xi32>
    %c0_5 = arith.constant 0 : index
    %c0_6 = arith.constant 0 : index
    %3 = vector.load %arg5[%c0_5, %c0_6] : memref<2x8xi32, #tpu.memory_space<vmem>>, vector<2x8xi32>
    tpu.vector_store %arg5[%c0_5, %c0_6], %2 {strides = array<i32>} : memref<2x8xi32, #tpu.memory_space<vmem>>, vector<2x8xi32>,
    return
  }
  func.func @transform_0(%arg0: i32, %arg1: i32) -> (i32, i32) {
    %c0_i32 = arith.constant 0 : i32
    return %arg0, %arg1 : i32, i32
  }
  func.func @transform_1(%arg0: i32, %arg1: i32) -> (i32, i32) {
    %c0_i32 = arith.constant 0 : i32
    return %arg0, %arg1 : i32, i32
  }
  func.func @transform_2(%arg0: i32, %arg1: i32) -> (i32, i32) {
    %c0_i32 = arith.constant 0 : i32
    return %arg0, %arg1 : i32, i32
  }
  func.func @transform_3(%arg0: i32, %arg1: i32) -> (i32, i32) {
    %c0_i32 = arith.constant 0 : i32
    return %arg0, %arg1 : i32, i32
  }
}

</mosaic_0001>

<llo_original>
// kernel: tpu_custom_call.1
$region0: #{tpu_custom_call.1}
  #allocation0 [shape = 'u32[]', space=smem, size = 0x4, offset = 0x4, fixed_abs, tag = 'smem constant byte address 0x4 - core index']
  #allocation1 [shape = 'u32[144,128]{1,0:T(1,128)}', space=vmem, size = 0x12000, scoped, tag = 'internal scratch']
  %s0 = inlined_call_operand.hbm [shape: s32[2,8], index: 0, kind: input, shape index: {}, may-alias: {0,2}]
  %s1 = inlined_call_operand.hbm [shape: s32[2,8], index: 1, kind: input, shape index: {}, may-alias: {1,3}]
  %s2 = inlined_call_operand.hbm [shape: s32[2,8], index: 2, kind: output, shape index: {0}, may-alias: {0,2}]
  %s3 = inlined_call_operand.hbm [shape: s32[2,8], index: 3, kind: output, shape index: {1}, may-alias: {1,3}]
  %4 = xla_tuple %s2, %s3
  %s5 = sld [smem:[#allocation0]]
  $region34: #{tpu_custom_call.1} parent=0
    _
  %s7 = ssub.s32 1, %s5
  %s8 = scalar_select 0, %s7, %s5
  $region1: #{tpu_custom_call.1} parent=0
    #allocation2 [shape = 'u8[1024]{0}', space=vmem, size = 0x400, scoped, tag = 'input window, operand 0, single buffered']
    #allocation3 [shape = 's32[1]{0}', space=sflag, size = 0x4, scoped, tag = 'scoped memory for tpu_custom_call.1']
    #allocation4 [shape = 's32[1]{0}', space=sflag, size = 0x4, scoped, tag = 'scoped memory for tpu_custom_call.1']
    #allocation5 [shape = 'u8[1024]{0}', space=vmem, size = 0x400, scoped, tag = 'input window, operand 1, single buffered']
    #allocation6 [shape = 's32[1]{0}', space=sflag, size = 0x4, scoped, tag = 'scoped memory for tpu_custom_call.1']
    #allocation7 [shape = 'u8[1024]{0}', space=vmem, size = 0x400, scoped, tag = 'output window, operand 0, single buffered']
    #allocation8 [shape = 'u8[1024]{0}', space=vmem, size = 0x400, scoped, tag = 'output window, operand 1, single buffered']
    #allocation9 [shape = 's32[1]{0}', space=sflag, size = 0x4, scoped, tag = 'scoped memory for tpu_custom_call.1']
    %9 = vsyncpa [#allocation3], 0
    %10 = vsyncpa [#allocation6], 0
    %11 = vsyncpa [#allocation4], 0
    %12 = vsyncpa [#allocation9], 0
    // Predicated region
    $region2: #{tpu_custom_call.1} parent=1 // pred_check
      _
    $region3: #{tpu_custom_call.1} parent=1 // pred_check_branch
      %14 = sbr.rel (0) target = $region5
    $region4: #{tpu_custom_call.1} parent=1 // pred_region
      %s16 = ssub.s32 32, 32
      %17 = vsyncadd [#allocation3], %s16
      %s19 = sshll.u32 [#allocation2], 4
      %s20 = int_to_ptr.vmem [resolvable:$true] %s19
      %22 = dma.hbm_to_vmem [thread:$0]  %s0, 32, %s20, [#allocation3]
    $region5: #{tpu_custom_call.1} parent=1 // pred_fallthru
      _
    // Predicated region
    $region6: #{tpu_custom_call.1} parent=1 // pred_check
      _
    $region7: #{tpu_custom_call.1} parent=1 // pred_check_branch
      %24 = sbr.rel (0) target = $region9
    $region8: #{tpu_custom_call.1} parent=1 // pred_region
      %s26 = ssub.s32 32, 32
      %27 = vsyncadd [#allocation6], %s26
      %s29 = sshll.u32 [#allocation5], 4
      %s30 = int_to_ptr.vmem [resolvable:$true] %s29
      %32 = dma.hbm_to_vmem [thread:$0]  %s1, 32, %s30, [#allocation6]
    $region9: #{tpu_custom_call.1} parent=1 // pred_fallthru
      _
    // Predicated region
    $region10: #{tpu_custom_call.1} parent=1 // pred_check
      _
    $region11: #{tpu_custom_call.1} parent=1 // pred_check_branch
      %34 = sbr.rel (0) target = $region13
    $region12: #{tpu_custom_call.1} parent=1 // pred_region
      %35 = dma.done [#allocation3], 32
    $region13: #{tpu_custom_call.1} parent=1 // pred_fallthru
      _
    // Predicated region
    $region14: #{tpu_custom_call.1} parent=1 // pred_check
      _
    $region15: #{tpu_custom_call.1} parent=1 // pred_check_branch
      %37 = sbr.rel (0) target = $region17
    $region16: #{tpu_custom_call.1} parent=1 // pred_region
      %38 = dma.done [#allocation6], 32
    $region17: #{tpu_custom_call.1} parent=1 // pred_fallthru
      _
    %v39 = vld [vmem:[#allocation2] sm:$0x3]
    %vm40 = vcmask 58368
    %41 = vst.msk [vmem:[#allocation7] sm:$0x3] %vm40, %v39
    %v42 = vld [vmem:[#allocation5] sm:$0x3]
    %43 = vst.msk [vmem:[#allocation8] sm:$0x3] %vm40, %v42
    // Predicated region
    $region18: #{tpu_custom_call.1} parent=1 // pred_check
      _
    $region19: #{tpu_custom_call.1} parent=1 // pred_check_branch
      %45 = sbr.rel (0) target = $region21
    $region20: #{tpu_custom_call.1} parent=1 // pred_region
      %s47 = ssub.s32 32, 32
      %48 = vsyncadd [#allocation4], %s47
      %s50 = sshll.u32 [#allocation7], 4
      %s51 = int_to_ptr.vmem [resolvable:$true] %s50
      %53 = dma.vmem_to_hbm [thread:$0]  %s51, 32, %s2, [#allocation4]
    $region21: #{tpu_custom_call.1} parent=1 // pred_fallthru
      _
    // Predicated region
    $region22: #{tpu_custom_call.1} parent=1 // pred_check
      _
    $region23: #{tpu_custom_call.1} parent=1 // pred_check_branch
      %55 = sbr.rel (0) target = $region25
    $region24: #{tpu_custom_call.1} parent=1 // pred_region
      %s57 = ssub.s32 32, 32
      %58 = vsyncadd [#allocation9], %s57
      %s60 = sshll.u32 [#allocation8], 4
      %s61 = int_to_ptr.vmem [resolvable:$true] %s60
      %63 = dma.vmem_to_hbm [thread:$0]  %s61, 32, %s3, [#allocation9]
    $region25: #{tpu_custom_call.1} parent=1 // pred_fallthru
      _
    // Predicated region
    $region26: #{tpu_custom_call.1} parent=1 // pred_check
      _
    $region27: #{tpu_custom_call.1} parent=1 // pred_check_branch
      %65 = sbr.rel (0) target = $region29
    $region28: #{tpu_custom_call.1} parent=1 // pred_region
      %66 = dma.done [#allocation4], 32
    $region29: #{tpu_custom_call.1} parent=1 // pred_fallthru
      _
    // Predicated region
    $region30: #{tpu_custom_call.1} parent=1 // pred_check
      _
    $region31: #{tpu_custom_call.1} parent=1 // pred_check_branch
      %68 = sbr.rel (0) target = $region33
    $region32: #{tpu_custom_call.1} parent=1 // pred_region
      %69 = dma.done [#allocation9], 32
    $region33: #{tpu_custom_call.1} parent=1 // pred_fallthru
      _
    %70 = vsyncpa [#allocation3], 1
    %71 = vsyncpa [#allocation6], 1
    %72 = vsyncpa [#allocation4], 1
    %73 = vsyncpa [#allocation9], 1

</llo_original>
